<compile_context>
chip_gen: v6e
topology: v6e:2x2x1
jax: 0.10.0
libtpu: 0.0.40
codegen_flags: <defaults>
</compile_context>

<pallas_src>
import functools

import jax
import jax.numpy as jnp
from jax import lax
from jax.experimental import pallas as pl
from jax.experimental.pallas import tpu as pltpu

TAU = 0.2          # temperature (kwargs of the loss in COSTA)
_EPS_SQ = 1e-24    # (1e-12)^2 : F.normalize eps applied to the squared norm


def _normalize(x, extra_scale=1.0):
    """x / max(||x||, 1e-12), optionally fused with an extra scalar scale."""
    ss = jnp.sum(x * x, axis=-1, keepdims=True)
    inv = lax.rsqrt(jnp.maximum(ss, _EPS_SQ))   # == 1 / max(||x||, 1e-12)
    return x * (inv * extra_scale)


def _dual_branch_contrast_kernel(
    h1_ref, h2_row_ref, h2_col_ref, out_ref,
    l_r_ref, l_c_ref, acc_ref,
    *, tau, n_rows):
    i = pl.program_id(0)
    j = pl.program_id(1)
    n_i = pl.num_programs(0)
    n_j = pl.num_programs(1)

    f32 = jnp.float32
    tau_inv = f32(1.0 / tau)
    mm_dtype = jnp.bfloat16 if h1_ref.dtype == jnp.bfloat16 else f32

    # Anchor rows: L2-normalize with 1/tau folded in (avoids an NxN divide).
    n1s = _normalize(h1_ref[...].astype(f32), extra_scale=1.0 / tau)
    # Sample (column) rows: L2-normalize.
    n2c = _normalize(h2_col_ref[...].astype(f32))

    # (tq, tk) tile of sim = <h1/||h1||, h2/||h2||> / tau.
    # dot_general contracts the last dims directly -> no transpose copy of h2.
    s = lax.dot_general(
        n1s.astype(mm_dtype), n2c.astype(mm_dtype),
        dimension_numbers=(((1,), (1,)), ((), ())),
        preferred_element_type=f32)

    # Bounded logits (|s| <= 1/tau) -> static shift, one exp per element
    # shared by BOTH the row and the column logsumexp accumulators.
    e = jnp.exp(s - tau_inv)
    row_sum = jnp.sum(e, axis=1, keepdims=True)    # (tq, 1)
    col_sum = jnp.sum(e, axis=0, keepdims=True)    # (1, tk)

    @pl.when(jnp.logical_and(i == 0, j == 0))
    def _init():
        acc_ref[...] = jnp.zeros_like(acc_ref)

    @pl.when(j == 0)
    def _row_start():
        l_r_ref[...] = row_sum
        # Positive-pair diagonal for this row tile, computed directly
        # (no NxN eye mask / where / extra cross-lane reduce).
        n2r = _normalize(h2_row_ref[...].astype(f32))
        d = jnp.sum(n1s * n2r, axis=-1, keepdims=True)            # (tq,1) = sim[i,i]
        acc_ref[...] = acc_ref[...] - 2.0 * jnp.sum(d, axis=0, keepdims=True)

    @pl.when(j > 0)
    def _row_acc():
        l_r_ref[...] = l_r_ref[...] + row_sum

    @pl.when(i == 0)
    def _col_start():
        l_c_ref[j] = col_sum

    @pl.when(i > 0)
    def _col_acc():
        l_c_ref[j] = l_c_ref[j] + col_sum

    @pl.when(j == n_j - 1)
    def _fold_row_lse():
        lse_r = tau_inv + jnp.log(l_r_ref[...])                   # (tq, 1)
        acc_ref[...] = acc_ref[...] + jnp.sum(lse_r, axis=0, keepdims=True)

    @pl.when(i == n_i - 1)
    def _fold_col_lse():
        lse_c = tau_inv + jnp.log(l_c_ref[j])                     # (1, tk)
        acc_ref[...] = acc_ref[...] + jnp.sum(lse_c, axis=1, keepdims=True)

    @pl.when(jnp.logical_and(i == n_i - 1, j == n_j - 1))
    def _final():
        # 0.5 * (loss1 + loss2) = (S_r + S_c - 2*S_diag) / (2N)
        out_ref[...] = acc_ref[...] * (0.5 / n_rows)


def _pick_block(n, max_block=512):
    """Largest multiple of 8 (<= max_block) dividing n, else the full axis."""
    if n % 8 != 0:
        return n
    t = min(max_block, n)
    t -= t % 8
    while t >= 8:
        if n % t == 0:
            return t
        t -= 8
    return n


def dual_branch_contrast(h1, h2, tau=TAU, block_rows=None, block_cols=None):
    """0.5 * (InfoNCE(h1, h2) + InfoNCE(h2, h1)) via a tiled Pallas kernel."""
    assert h1.shape == h2.shape and h1.ndim == 2
    n, d = h1.shape
    # Keep double-buffered input tiles + the (tq, tk) sim/exp tiles comfortably
    # inside scoped VMEM even for wide embeddings.
    max_blk = 512 if d <= 1024 else 256
    tq = block_rows if block_rows is not None else _pick_block(n, max_blk)
    tk = block_cols if block_cols is not None else _pick_block(n, max_blk)
    assert n % tq == 0 and n % tk == 0, "tile sizes must divide N"
    n_i, n_j = n // tq, n // tk

    kernel = functools.partial(_dual_branch_contrast_kernel, tau=tau, n_rows=n)
    out = pl.pallas_call(
        kernel,
        out_shape=jax.ShapeDtypeStruct((1, 1), jnp.float32),
        grid_spec=pltpu.PrefetchScalarGridSpec(
            num_scalar_prefetch=0,
            grid=(n_i, n_j),
            in_specs=[
                pl.BlockSpec((tq, d), lambda i, j: (i, 0)),  # h1 anchor rows
                pl.BlockSpec((tq, d), lambda i, j: (i, 0)),  # h2 rows (positives)
                pl.BlockSpec((tk, d), lambda i, j: (j, 0)),  # h2 cols (negatives)
            ],
            out_specs=pl.BlockSpec((1, 1), lambda i, j: (0, 0)),
            scratch_shapes=[
                pltpu.VMEM((tq, 1), jnp.float32),        # running row exp-sums
                pltpu.VMEM((n_j, 1, tk), jnp.float32),   # running col exp-sums
                pltpu.VMEM((1, 1), jnp.float32),         # scalar loss accumulator
            ]),
        # Both grid axes carry accumulator state -> "arbitrary".
        compiler_params=pltpu.CompilerParams(
            dimension_semantics=("arbitrary", "arbitrary")),
    )(h1, h2, h2)
    return out[0, 0]


def _reference(h1, h2, tau=TAU):
    """Pure-JAX reference mirroring PyTorch InfoNCE / DualBranchContrast."""
    def info_nce(a, s):
        an = a / jnp.maximum(jnp.linalg.norm(a, axis=-1, keepdims=True), 1e-12)
        sn = s / jnp.maximum(jnp.linalg.norm(s, axis=-1, keepdims=True), 1e-12)
        sim = an @ sn.T / tau
        log_prob = sim - jax.nn.logsumexp(sim, axis=1, keepdims=True)
        return -jnp.mean(jnp.diag(log_prob))
    return 0.5 * (info_nce(h1, h2) + info_nce(h2, h1))


if __name__ == "__main__":
    key = jax.random.PRNGKey(0)
    k1, k2 = jax.random.split(key)
    N, D = 16, 32  # small node-embedding shapes (N nodes, hidden dim D)
    h1 = jax.random.normal(k1, (N, D), dtype=jnp.float32)
    h2 = jax.random.normal(k2, (N, D), dtype=jnp.float32)

    ref = _reference(h1, h2)

    # (a) Force 8x8 tiles so the (2, 2) grid exercises the tiled LSE path.
    loss_tiled = dual_branch_contrast(h1, h2, block_rows=8, block_cols=8)
    jax.block_until_ready(loss_tiled)
    assert jnp.allclose(loss_tiled, ref, atol=1e-4, rtol=1e-4), (loss_tiled, ref)

    # (b) Default tiling (single tile at this size).
    loss_default = dual_branch_contrast(h1, h2)
    jax.block_until_ready(loss_default)
    assert jnp.allclose(loss_default, ref, atol=1e-4, rtol=1e-4), (loss_default, ref)

    print("KERNEL_OK")
</pallas_src>

<mosaic_0001>
module attributes {stable_mosaic.version = 11 : i64} {
  func.func @_dual_branch_contrast_kernel(%arg0: i32, %arg1: i32, %arg2: memref<8x32xf32, #tpu.memory_space<vmem>>, %arg3: memref<8x32xf32, #tpu.memory_space<vmem>>, %arg4: memref<8x32xf32, #tpu.memory_space<vmem>>, %arg5: memref<1x1xf32, #tpu.memory_space<vmem>>, %arg6: memref<8x1xf32, #tpu.memory_space<vmem>>, %arg7: memref<2x1x8xf32, #tpu.memory_space<vmem>>, %arg8: memref<1x1xf32, #tpu.memory_space<vmem>>) attributes {dimension_semantics = [#tpu.dimension_semantics<arbitrary>, #tpu.dimension_semantics<arbitrary>], iteration_bounds = array<i64: 2, 2>, scalar_prefetch = 0 : i64, scratch_operands = 3 : i64, tpu.core_type = #tpu.core_type<tc>, window_params = [{transform_indices = @transform_0, window_bounds = array<i64: 8, 32>}, {transform_indices = @transform_1, window_bounds = array<i64: 8, 32>}, {transform_indices = @transform_2, window_bounds = array<i64: 8, 32>}, {pipeline_mode = #tpu.pipeline_mode<synchronous>, transform_indices = @transform_3, window_bounds = array<i64: 1, 1>}]} {
    %c0 = arith.constant 0 : index
    %c0_0 = arith.constant 0 : index
    %0 = vector.load %arg2[%c0, %c0_0] : memref<8x32xf32, #tpu.memory_space<vmem>>, vector<8x32xf32>
    %1 = arith.mulf %0, %0 : vector<8x32xf32>
    %cst = arith.constant dense<0.000000e+00> : vector<8xf32>
    %2 = vector.multi_reduction <add>, %1, %cst [1] : vector<8x32xf32> to vector<8xf32>
    %3 = vector.shape_cast %2 : vector<8xf32> to vector<8x1xf32>
    %cst_1 = arith.constant 1.000000e-24 : f32
    %4 = vector.broadcast %cst_1 : f32 to vector<8x1xf32>
    %5 = arith.maximumf %3, %4 : vector<8x1xf32>
    %6 = math.rsqrt %5 : vector<8x1xf32>
    %cst_2 = arith.constant 5.000000e+00 : f32
    %7 = vector.broadcast %cst_2 : f32 to vector<8x1xf32>
    %8 = arith.mulf %6, %7 : vector<8x1xf32>
    %9 = vector.broadcast %8 : vector<8x1xf32> to vector<8x32xf32>
    %10 = arith.mulf %0, %9 : vector<8x32xf32>
    %c0_3 = arith.constant 0 : index
    %c0_4 = arith.constant 0 : index
    %11 = vector.load %arg4[%c0_3, %c0_4] : memref<8x32xf32, #tpu.memory_space<vmem>>, vector<8x32xf32>
    %12 = arith.mulf %11, %11 : vector<8x32xf32>
    %cst_5 = arith.constant dense<0.000000e+00> : vector<8xf32>
    %13 = vector.multi_reduction <add>, %12, %cst_5 [1] : vector<8x32xf32> to vector<8xf32>
    %14 = vector.shape_cast %13 : vector<8xf32> to vector<8x1xf32>
    %cst_6 = arith.constant 1.000000e-24 : f32
    %15 = vector.broadcast %cst_6 : f32 to vector<8x1xf32>
    %16 = arith.maximumf %14, %15 : vector<8x1xf32>
    %17 = math.rsqrt %16 : vector<8x1xf32>
    %cst_7 = arith.constant 1.000000e+00 : f32
    %18 = vector.broadcast %cst_7 : f32 to vector<8x1xf32>
    %19 = arith.mulf %17, %18 : vector<8x1xf32>
    %20 = vector.broadcast %19 : vector<8x1xf32> to vector<8x32xf32>
    %21 = arith.mulf %11, %20 : vector<8x32xf32>
    %cst_8 = arith.constant dense<0.000000e+00> : vector<8x8xf32>
    %22 = tpu.matmul %10, %21, %cst_8 {dimension_numbers = #tpu.dot_dimension_numbers<[1], [1], [0], [0], [0, 0, 1, 0], [], []>} : vector<8x32xf32>, vector<8x32xf32>, vector<8x8xf32> -> vector<8x8xf32>
    %cst_9 = arith.constant 5.000000e+00 : f32
    %23 = vector.broadcast %cst_9 : f32 to vector<8x8xf32>
    %24 = arith.subf %22, %23 : vector<8x8xf32>
    %25 = math.exp %24 : vector<8x8xf32>
    %cst_10 = arith.constant dense<0.000000e+00> : vector<8xf32>
    %26 = vector.multi_reduction <add>, %25, %cst_10 [1] : vector<8x8xf32> to vector<8xf32>
    %27 = vector.shape_cast %26 : vector<8xf32> to vector<8x1xf32>
    %cst_11 = arith.constant dense<0.000000e+00> : vector<8xf32>
    %28 = vector.multi_reduction <add>, %25, %cst_11 [0] : vector<8x8xf32> to vector<8xf32>
    %29 = vector.shape_cast %28 : vector<8xf32> to vector<1x8xf32>
    %c0_i32 = arith.constant 0 : i32
    %30 = arith.cmpi eq, %arg0, %c0_i32 : i32
    %c0_i32_12 = arith.constant 0 : i32
    %31 = arith.cmpi eq, %arg1, %c0_i32_12 : i32
    %32 = arith.andi %30, %31 : i1
    %33 = arith.extui %32 : i1 to i32
    %c0_i32_13 = arith.constant 0 : i32
    %34 = arith.cmpi ne, %33, %c0_i32_13 : i32
    scf.if %34 {
      %cst_30 = arith.constant 0.000000e+00 : f32
      %58 = vector.broadcast %cst_30 : f32 to vector<1x1xf32>
      %c0_31 = arith.constant 0 : index
      %c0_32 = arith.constant 0 : index
      %59 = vector.load %arg8[%c0_31, %c0_32] : memref<1x1xf32, #tpu.memory_space<vmem>>, vector<1x1xf32>
      tpu.vector_store %arg8[%c0_31, %c0_32], %58 {strides = array<i32>} : memref<1x1xf32, #tpu.memory_space<vmem>>, vector<1x1xf32>,
    } else {
    }
    %c0_i32_14 = arith.constant 0 : i32
    %35 = arith.cmpi eq, %arg1, %c0_i32_14 : i32
    %36 = arith.extui %35 : i1 to i32
    %c0_i32_15 = arith.constant 0 : i32
    %37 = arith.cmpi ne, %36, %c0_i32_15 : i32
    scf.if %37 {
      %c0_30 = arith.constant 0 : index
      %c0_31 = arith.constant 0 : index
      %58 = vector.load %arg6[%c0_30, %c0_31] : memref<8x1xf32, #tpu.memory_space<vmem>>, vector<8x1xf32>
      tpu.vector_store %arg6[%c0_30, %c0_31], %27 {strides = array<i32>} : memref<8x1xf32, #tpu.memory_space<vmem>>, vector<8x1xf32>,
      %c0_32 = arith.constant 0 : index
      %c0_33 = arith.constant 0 : index
      %59 = vector.load %arg3[%c0_32, %c0_33] : memref<8x32xf32, #tpu.memory_space<vmem>>, vector<8x32xf32>
      %60 = arith.mulf %59, %59 : vector<8x32xf32>
      %cst_34 = arith.constant dense<0.000000e+00> : vector<8xf32>
      %61 = vector.multi_reduction <add>, %60, %cst_34 [1] : vector<8x32xf32> to vector<8xf32>
      %62 = vector.shape_cast %61 : vector<8xf32> to vector<8x1xf32>
      %cst_35 = arith.constant 1.000000e-24 : f32
      %63 = vector.broadcast %cst_35 : f32 to vector<8x1xf32>
      %64 = arith.maximumf %62, %63 : vector<8x1xf32>
      %65 = math.rsqrt %64 : vector<8x1xf32>
      %cst_36 = arith.constant 1.000000e+00 : f32
      %66 = vector.broadcast %cst_36 : f32 to vector<8x1xf32>
      %67 = arith.mulf %65, %66 : vector<8x1xf32>
      %68 = vector.broadcast %67 : vector<8x1xf32> to vector<8x32xf32>
      %69 = arith.mulf %59, %68 : vector<8x32xf32>
      %70 = arith.mulf %10, %69 : vector<8x32xf32>
      %cst_37 = arith.constant dense<0.000000e+00> : vector<8xf32>
      %71 = vector.multi_reduction <add>, %70, %cst_37 [1] : vector<8x32xf32> to vector<8xf32>
      %72 = vector.shape_cast %71 : vector<8xf32> to vector<8x1xf32>
      %c0_38 = arith.constant 0 : index
      %c0_39 = arith.constant 0 : index
      %73 = vector.load %arg8[%c0_38, %c0_39] : memref<1x1xf32, #tpu.memory_space<vmem>>, vector<1x1xf32>
      %cst_40 = arith.constant dense<0.000000e+00> : vector<1xf32>
      %74 = vector.multi_reduction <add>, %72, %cst_40 [0] : vector<8x1xf32> to vector<1xf32>
      %75 = vector.shape_cast %74 : vector<1xf32> to vector<1x1xf32>
      %cst_41 = arith.constant 2.000000e+00 : f32
      %76 = vector.broadcast %cst_41 : f32 to vector<1x1xf32>
      %77 = arith.mulf %76, %75 : vector<1x1xf32>
      %78 = arith.subf %73, %77 : vector<1x1xf32>
      %c0_42 = arith.constant 0 : index
      %c0_43 = arith.constant 0 : index
      %79 = vector.load %arg8[%c0_42, %c0_43] : memref<1x1xf32, #tpu.memory_space<vmem>>, vector<1x1xf32>
      tpu.vector_store %arg8[%c0_42, %c0_43], %78 {strides = array<i32>} : memref<1x1xf32, #tpu.memory_space<vmem>>, vector<1x1xf32>,
    } else {
    }
    %c0_i32_16 = arith.constant 0 : i32
    %38 = arith.cmpi sgt, %arg1, %c0_i32_16 : i32
    %39 = arith.extui %38 : i1 to i32
    %c0_i32_17 = arith.constant 0 : i32
    %40 = arith.cmpi ne, %39, %c0_i32_17 : i32
    scf.if %40 {
      %c0_30 = arith.constant 0 : index
      %c0_31 = arith.constant 0 : index
      %58 = vector.load %arg6[%c0_30, %c0_31] : memref<8x1xf32, #tpu.memory_space<vmem>>, vector<8x1xf32>
      %59 = arith.addf %58, %27 : vector<8x1xf32>
      %c0_32 = arith.constant 0 : index
      %c0_33 = arith.constant 0 : index
      %60 = vector.load %arg6[%c0_32, %c0_33] : memref<8x1xf32, #tpu.memory_space<vmem>>, vector<8x1xf32>
      tpu.vector_store %arg6[%c0_32, %c0_33], %59 {strides = array<i32>} : memref<8x1xf32, #tpu.memory_space<vmem>>, vector<8x1xf32>,
    } else {
    }
    %c0_i32_18 = arith.constant 0 : i32
    %41 = arith.cmpi eq, %arg0, %c0_i32_18 : i32
    %42 = arith.extui %41 : i1 to i32
    %c0_i32_19 = arith.constant 0 : i32
    %43 = arith.cmpi ne, %42, %c0_i32_19 : i32
    scf.if %43 {
      %58 = arith.index_cast %arg1 : i32 to index
      %c0_30 = arith.constant 0 : index
      %c0_31 = arith.constant 0 : index
      %59 = vector.load %arg7[%58, %c0_30, %c0_31] : memref<2x1x8xf32, #tpu.memory_space<vmem>>, vector<1x1x8xf32>
      %60 = vector.shape_cast %59 : vector<1x1x8xf32> to vector<1x8xf32>
      %61 = vector.shape_cast %29 : vector<1x8xf32> to vector<1x1x8xf32>
      tpu.vector_store %arg7[%58, %c0_30, %c0_31], %61 {strides = array<i32>} : memref<2x1x8xf32, #tpu.memory_space<vmem>>, vector<1x1x8xf32>,
    } else {
    }
    %c0_i32_20 = arith.constant 0 : i32
    %44 = arith.cmpi sgt, %arg0, %c0_i32_20 : i32
    %45 = arith.extui %44 : i1 to i32
    %c0_i32_21 = arith.constant 0 : i32
    %46 = arith.cmpi ne, %45, %c0_i32_21 : i32
    scf.if %46 {
      %58 = arith.index_cast %arg1 : i32 to index
      %c0_30 = arith.constant 0 : index
      %c0_31 = arith.constant 0 : index
      %59 = vector.load %arg7[%58, %c0_30, %c0_31] : memref<2x1x8xf32, #tpu.memory_space<vmem>>, vector<1x1x8xf32>
      %60 = vector.shape_cast %59 : vector<1x1x8xf32> to vector<1x8xf32>
      %61 = arith.addf %60, %29 : vector<1x8xf32>
      %62 = arith.index_cast %arg1 : i32 to index
      %c0_32 = arith.constant 0 : index
      %c0_33 = arith.constant 0 : index
      %63 = vector.load %arg7[%62, %c0_32, %c0_33] : memref<2x1x8xf32, #tpu.memory_space<vmem>>, vector<1x1x8xf32>
      %64 = vector.shape_cast %63 : vector<1x1x8xf32> to vector<1x8xf32>
      %65 = vector.shape_cast %61 : vector<1x8xf32> to vector<1x1x8xf32>
      tpu.vector_store %arg7[%62, %c0_32, %c0_33], %65 {strides = array<i32>} : memref<2x1x8xf32, #tpu.memory_space<vmem>>, vector<1x1x8xf32>,
    } else {
    }
    %c1_i32 = arith.constant 1 : i32
    %47 = arith.cmpi eq, %arg1, %c1_i32 : i32
    %48 = arith.extui %47 : i1 to i32
    %cst_22 = arith.constant 5.000000e+00 : f32
    %c0_i32_23 = arith.constant 0 : i32
    %49 = arith.cmpi ne, %48, %c0_i32_23 : i32
    scf.if %49 {
      %c0_30 = arith.constant 0 : index
      %c0_31 = arith.constant 0 : index
      %58 = vector.load %arg6[%c0_30, %c0_31] : memref<8x1xf32, #tpu.memory_space<vmem>>, vector<8x1xf32>
      %59 = math.log %58 : vector<8x1xf32>
      %60 = vector.broadcast %cst_22 : f32 to vector<8x1xf32>
      %61 = arith.addf %60, %59 : vector<8x1xf32>
      %c0_32 = arith.constant 0 : index
      %c0_33 = arith.constant 0 : index
      %62 = vector.load %arg8[%c0_32, %c0_33] : memref<1x1xf32, #tpu.memory_space<vmem>>, vector<1x1xf32>
      %cst_34 = arith.constant dense<0.000000e+00> : vector<1xf32>
      %63 = vector.multi_reduction <add>, %61, %cst_34 [0] : vector<8x1xf32> to vector<1xf32>
      %64 = vector.shape_cast %63 : vector<1xf32> to vector<1x1xf32>
      %65 = arith.addf %62, %64 : vector<1x1xf32>
      %c0_35 = arith.constant 0 : index
      %c0_36 = arith.constant 0 : index
      %66 = vector.load %arg8[%c0_35, %c0_36] : memref<1x1xf32, #tpu.memory_space<vmem>>, vector<1x1xf32>
      tpu.vector_store %arg8[%c0_35, %c0_36], %65 {strides = array<i32>} : memref<1x1xf32, #tpu.memory_space<vmem>>, vector<1x1xf32>,
    } else {
    }
    %c1_i32_24 = arith.constant 1 : i32
    %50 = arith.cmpi eq, %arg0, %c1_i32_24 : i32
    %51 = arith.extui %50 : i1 to i32
    %cst_25 = arith.constant 5.000000e+00 : f32
    %c0_i32_26 = arith.constant 0 : i32
    %52 = arith.cmpi ne, %51, %c0_i32_26 : i32
    scf.if %52 {
      %58 = arith.index_cast %arg1 : i32 to index
      %c0_30 = arith.constant 0 : index
      %c0_31 = arith.constant 0 : index
      %59 = vector.load %arg7[%58, %c0_30, %c0_31] : memref<2x1x8xf32, #tpu.memory_space<vmem>>, vector<1x1x8xf32>
      %60 = vector.shape_cast %59 : vector<1x1x8xf32> to vector<1x8xf32>
      %61 = math.log %60 : vector<1x8xf32>
      %62 = vector.broadcast %cst_25 : f32 to vector<1x8xf32>
      %63 = arith.addf %62, %61 : vector<1x8xf32>
      %c0_32 = arith.constant 0 : index
      %c0_33 = arith.constant 0 : index
      %64 = vector.load %arg8[%c0_32, %c0_33] : memref<1x1xf32, #tpu.memory_space<vmem>>, vector<1x1xf32>
      %cst_34 = arith.constant dense<0.000000e+00> : vector<1xf32>
      %65 = vector.multi_reduction <add>, %63, %cst_34 [1] : vector<1x8xf32> to vector<1xf32>
      %66 = vector.shape_cast %65 : vector<1xf32> to vector<1x1xf32>
      %67 = arith.addf %64, %66 : vector<1x1xf32>
      %c0_35 = arith.constant 0 : index
      %c0_36 = arith.constant 0 : index
      %68 = vector.load %arg8[%c0_35, %c0_36] : memref<1x1xf32, #tpu.memory_space<vmem>>, vector<1x1xf32>
      tpu.vector_store %arg8[%c0_35, %c0_36], %67 {strides = array<i32>} : memref<1x1xf32, #tpu.memory_space<vmem>>, vector<1x1xf32>,
    } else {
    }
    %c1_i32_27 = arith.constant 1 : i32
    %53 = arith.cmpi eq, %arg0, %c1_i32_27 : i32
    %c1_i32_28 = arith.constant 1 : i32
    %54 = arith.cmpi eq, %arg1, %c1_i32_28 : i32
    %55 = arith.andi %53, %54 : i1
    %56 = arith.extui %55 : i1 to i32
    %c0_i32_29 = arith.constant 0 : i32
    %57 = arith.cmpi ne, %56, %c0_i32_29 : i32
    scf.if %57 {
      %c0_30 = arith.constant 0 : index
      %c0_31 = arith.constant 0 : index
      %58 = vector.load %arg8[%c0_30, %c0_31] : memref<1x1xf32, #tpu.memory_space<vmem>>, vector<1x1xf32>
      %cst_32 = arith.constant 3.125000e-02 : f32
      %59 = vector.broadcast %cst_32 : f32 to vector<1x1xf32>
      %60 = arith.mulf %58, %59 : vector<1x1xf32>
      %c0_33 = arith.constant 0 : index
      %c0_34 = arith.constant 0 : index
      %61 = vector.load %arg5[%c0_33, %c0_34] : memref<1x1xf32, #tpu.memory_space<vmem>>, vector<1x1xf32>
      tpu.vector_store %arg5[%c0_33, %c0_34], %60 {strides = array<i32>} : memref<1x1xf32, #tpu.memory_space<vmem>>, vector<1x1xf32>,
    } else {
    }
    return
  }
  func.func @transform_0(%arg0: i32, %arg1: i32) -> (i32, i32) {
    %c0_i32 = arith.constant 0 : i32
    %c0_i32_0 = arith.constant 0 : i32
    return %arg0, %c0_i32 : i32, i32
  }
  func.func @transform_1(%arg0: i32, %arg1: i32) -> (i32, i32) {
    %c0_i32 = arith.constant 0 : i32
    %c0_i32_0 = arith.constant 0 : i32
    return %arg0, %c0_i32 : i32, i32
  }
  func.func @transform_2(%arg0: i32, %arg1: i32) -> (i32, i32) {
    %c0_i32 = arith.constant 0 : i32
    %c0_i32_0 = arith.constant 0 : i32
    return %arg1, %c0_i32 : i32, i32
  }
  func.func @transform_3(%arg0: i32, %arg1: i32) -> (i32, i32) {
    %c0_i32 = arith.constant 0 : i32
    %c0_i32_0 = arith.constant 0 : i32
    %c0_i32_1 = arith.constant 0 : i32
    return %c0_i32, %c0_i32_0 : i32, i32
  }
}

</mosaic_0001>

<llo_original>
// kernel: tpu_custom_call.1
$region0: #{tpu_custom_call.1}
  #allocation0 [shape = 'u32[]', space=smem, size = 0x4, offset = 0x4, fixed_abs, tag = 'smem constant byte address 0x4 - core index']
  #allocation1 [shape = 'u32[144,128]{1,0:T(1,128)}', space=vmem, size = 0x12000, scoped, tag = 'internal scratch']
  #allocation2 [shape = 'f32[8,1]{1,0:T(8,128)}', space=vmem, size = 0x1000, scoped, tag = 'scratch operand']
  #allocation3 [shape = 'f32[2,1,8]{2,1,0:T(1,128)}', space=vmem, size = 0x400, scoped, tag = 'scratch operand']
  #allocation4 [shape = 'f32[1,1]{1,0:T(1,128)}', space=vmem, size = 0x200, scoped, tag = 'scratch operand']
  %s0 = inlined_call_operand.hbm [shape: f32[16,32], index: 0, kind: input, shape index: {}]
  %s1 = inlined_call_operand.hbm [shape: f32[16,32], index: 1, kind: input, shape index: {}]
  %s2 = inlined_call_operand.hbm [shape: f32[16,32], index: 2, kind: input, shape index: {}]
  %s3 = inlined_call_operand.hbm [shape: f32[1,1], index: 3, kind: output, shape index: {}]
  %s4 = sld [smem:[#allocation0]]
  $region89: #{tpu_custom_call.1} parent=0
    _
  %s6 = ssub.s32 1, %s4
  %s7 = scalar_select 0, %s6, %s4
  $region1: #{tpu_custom_call.1} parent=0
    #allocation5 [shape = 'u8[8192]{0}', space=vmem, size = 0x2000, scoped, tag = 'input window, operand 0']
    #allocation6 [shape = 's32[2]{0}', space=sflag, size = 0x8, scoped, tag = 'scoped memory for tpu_custom_call.1']
    #allocation7 [shape = 's32[2]{0}', space=sflag, size = 0x8, scoped, tag = 'scoped memory for tpu_custom_call.1']
    #allocation8 [shape = 'u8[8192]{0}', space=vmem, size = 0x2000, scoped, tag = 'input window, operand 1']
    #allocation9 [shape = 's32[2]{0}', space=sflag, size = 0x8, scoped, tag = 'scoped memory for tpu_custom_call.1']
    #allocation10 [shape = 'u8[8192]{0}', space=vmem, size = 0x2000, scoped, tag = 'input window, operand 2']
    #allocation11 [shape = 'u8[512]{0}', space=vmem, size = 0x400, scoped, tag = 'output window, operand 0, single buffered']
    %8 = vsyncpa [#allocation6], 0
    %s9 = scalar_lea.sflag [#allocation6], 1
    %10 = vsyncpa %s9, 0
    %11 = vsyncpa [#allocation9], 0
    %s12 = scalar_lea.sflag [#allocation9], 1
    %13 = vsyncpa %s12, 0
    %14 = vsyncpa [#allocation7], 0
    loop: start=0, step=1, limit=6
    $region2: #{tpu_custom_call.1} parent=1 // loop_pre_header
      _
    $region3: #{tpu_custom_call.1} parent=1 // loop_header
      %s16 = sphi 0, %s20
      %p17 = scmp.ge.s32.totalorder %s16, 6
      %s23 = sphi 0, %s35
      %s24 = sphi 0, %s31
      %s25 = sphi 0, %s23
      %s26 = sphi 0, %s24
      %s27 = sphi 0, %s25
      %s28 = sphi 0, %s26
      %s38 = sphi 0, %s40
      %s41 = sphi 0, %s38
      %s42 = sphi 0, %s41
      %s58 = sphi 0, %s42
      %s64 = sphi 0, %s66
      %s67 = sphi 0, %s64
      %s68 = sphi 0, %s67
      %s84 = sphi 0, %s68
      %s90 = sphi 0, %s92
      %s93 = sphi 0, %s90
      %s94 = sphi 0, %s93
      %s110 = sphi 0, %s94
      %s114 = sphi 0, %s114
      %s116 = sphi 0, %s114
      %s117 = sphi 0, %s116
      %s131 = sphi 0, %s117
    $region4: #{tpu_custom_call.1} parent=1 // loop_header_branch
      %19 = sbr.rel (%p17) target = $region8
    $region5: #{tpu_custom_call.1} parent=1 // loop_body
      %s21 = ssub.s32 %s16, 1
      %s22 = ssub.s32 %s16, 2
      %s29 = sadd.s32 1, %s24
      %p30 = scmp.ge.s32.totalorder %s29, 2
      %s31 = scalar_select %p30, 0, %s29
      %s32 = sadd.s32 1, %s23
      %s33 = scalar_select %p30, %s32, %s23
      %p34 = scmp.ge.s32.totalorder %s33, 2
      %s35 = scalar_select %p34, 0, %s33
      %s36 = ssub.s32 %s23, %s35
      %p37 = scmp.eq.s32.totalorder %s36, 0
      %s39 = sadd.s32 %s38, 1
      %s40 = scalar_select %p37, %s38, %s39
      %p43 = pneg %p37
      %p44 = scmp.eq.s32.totalorder %s16, 3
      %p45 = por %p43, %p44
      %p46 = scmp.ne.s32.totalorder %s38, %s41
      %p47 = scmp.eq.s32.totalorder %s16, 0
      %p48 = por %p46, %p47
      %p49 = scmp.ne.s32.totalorder %s38, %s41
      %p50 = scmp.eq.s32.totalorder %s21, 3
      %p51 = por %p49, %p50
      %p52 = scmp.ne.s32.totalorder %s41, %s42
      %p53 = scmp.eq.s32.totalorder %s21, 0
      %p54 = por %p52, %p53
      %p55 = scmp.ne.s32.totalorder %s41, %s42
      %p56 = scmp.eq.s32.totalorder %s22, 3
      %p57 = por %p55, %p56
      %p59 = scmp.ne.s32.totalorder %s42, %s58
      %p60 = scmp.eq.s32.totalorder %s22, 0
      %p61 = por %p59, %p60
      %s62 = ssub.s32 %s23, %s35
      %p63 = scmp.eq.s32.totalorder %s62, 0
      %s65 = sadd.s32 %s64, 1
      %s66 = scalar_select %p63, %s64, %s65
      %p69 = pneg %p63
      %p70 = scmp.eq.s32.totalorder %s16, 3
      %p71 = por %p69, %p70
      %p72 = scmp.ne.s32.totalorder %s64, %s67
      %p73 = scmp.eq.s32.totalorder %s16, 0
      %p74 = por %p72, %p73
      %p75 = scmp.ne.s32.totalorder %s64, %s67
      %p76 = scmp.eq.s32.totalorder %s21, 3
      %p77 = por %p75, %p76
      %p78 = scmp.ne.s32.totalorder %s67, %s68
      %p79 = scmp.eq.s32.totalorder %s21, 0
      %p80 = por %p78, %p79
      %p81 = scmp.ne.s32.totalorder %s67, %s68
      %p82 = scmp.eq.s32.totalorder %s22, 3
      %p83 = por %p81, %p82
      %p85 = scmp.ne.s32.totalorder %s68, %s84
      %p86 = scmp.eq.s32.totalorder %s22, 0
      %p87 = por %p85, %p86
      %s88 = ssub.s32 %s24, %s31
      %p89 = scmp.eq.s32.totalorder %s88, 0
      %s91 = sadd.s32 %s90, 1
      %s92 = scalar_select %p89, %s90, %s91
      %p95 = pneg %p89
      %p96 = scmp.eq.s32.totalorder %s16, 3
      %p97 = por %p95, %p96
      %p98 = scmp.ne.s32.totalorder %s90, %s93
      %p99 = scmp.eq.s32.totalorder %s16, 0
      %p100 = por %p98, %p99
      %p101 = scmp.ne.s32.totalorder %s90, %s93
      %p102 = scmp.eq.s32.totalorder %s21, 3
      %p103 = por %p101, %p102
      %p104 = scmp.ne.s32.totalorder %s93, %s94
      %p105 = scmp.eq.s32.totalorder %s21, 0
      %p106 = por %p104, %p105
      %p107 = scmp.ne.s32.totalorder %s93, %s94
      %p108 = scmp.eq.s32.totalorder %s22, 3
      %p109 = por %p107, %p108
      %p111 = scmp.ne.s32.totalorder %s94, %s110
      %p112 = scmp.eq.s32.totalorder %s22, 0
      %p113 = por %p111, %p112
      %s115 = sadd.s32 %s114, 1
      %p118 = scmp.eq.s32.totalorder %s16, 3
      %p119 = scmp.ne.s32.totalorder %s114, %s116
      %p120 = scmp.eq.s32.totalorder %s16, 0
      %p121 = por %p119, %p120
      %p122 = scmp.ne.s32.totalorder %s114, %s116
      %p123 = scmp.eq.s32.totalorder %s21, 3
      %p124 = por %p122, %p123
      %p125 = scmp.ne.s32.totalorder %s116, %s117
      %p126 = scmp.eq.s32.totalorder %s21, 0
      %p127 = por %p125, %p126
      %p128 = scmp.ne.s32.totalorder %s116, %s117
      %p129 = scmp.eq.s32.totalorder %s22, 3
      %p130 = por %p128, %p129
      %p132 = scmp.ne.s32.totalorder %s117, %s131
      %p133 = scmp.eq.s32.totalorder %s22, 0
      %p134 = por %p132, %p133
      %p135 = scmp.le.s32.totalorder 1, %s16
      %p136 = scmp.lt.s32.totalorder %s16, 5
      %p137 = pnand %p135, %p136
      %p138 = pneg %p137
      // Predicated region
      $region9: #{tpu_custom_call.1} parent=5 // pred_check
        _
      $region10: #{tpu_custom_call.1} parent=5 // pred_check_branch
        %140 = sbr.rel (%p137) target = $region12
      $region11: #{tpu_custom_call.1} parent=5 // pred_region
        %s141 = ssub.s32 %s16, 1
      $region12: #{tpu_custom_call.1} parent=5 // pred_fallthru
        _
      %p142 = scmp.lt.s32.totalorder %s16, 4
      // Predicated region
      $region13: #{tpu_custom_call.1} parent=5 // pred_check
        %p143 = pneg %p142
      $region14: #{tpu_custom_call.1} parent=5 // pred_check_branch
        %145 = sbr.rel (%p143) target = $region16
      $region15: #{tpu_custom_call.1} parent=5 // pred_region
        // Predicated region
        $region17: #{tpu_custom_call.1} parent=15 // pred_check
          %p146 = pneg %p48
        $region18: #{tpu_custom_call.1} parent=15 // pred_check_branch
          %148 = sbr.rel (%p146) target = $region20
        $region19: #{tpu_custom_call.1} parent=15 // pred_region
          %s149 = sand.u32 %s38, 1
          %s150 = scalar_lea.sflag [#allocation6], %s149
          %s151 = sand.u32 %s38, 1
          %s152 = smul.addr %s151, 8
          %s153 = scalar_lea.vmem [#allocation5], %s152
          %s155 = ssub.s32 128, 128
          %156 = vsyncadd %s150, %s155
          %s157 = smul.addr %s23, 128
          %s158 = scalar_lea.hbm %s0, %s157
          %s160 = sshll.u32 %s153, 4
          %s161 = int_to_ptr.vmem [resolvable:$true] %s160
          %163 = dma.hbm_to_vmem [thread:$0]  %s158, 128, %s161, %s150
        $region20: #{tpu_custom_call.1} parent=15 // pred_fallthru
          _
        // Predicated region
        $region21: #{tpu_custom_call.1} parent=15 // pred_check
          %p164 = pneg %p74
        $region22: #{tpu_custom_call.1} parent=15 // pred_check_branch
          %166 = sbr.rel (%p164) target = $region24
        $region23: #{tpu_custom_call.1} parent=15 // pred_region
          %s167 = sand.u32 %s16, 1
          %s168 = scalar_lea.sflag [#allocation9], %s167
          %s169 = sand.u32 %s64, 1
          %s170 = smul.addr %s169, 8
          %s171 = scalar_lea.vmem [#allocation8], %s170
          %s173 = ssub.s32 128, 128
          %174 = vsyncadd %s168, %s173
          %s175 = smul.addr %s23, 128
          %s176 = scalar_lea.hbm %s1, %s175
          %s178 = sshll.u32 %s171, 4
          %s179 = int_to_ptr.vmem [resolvable:$true] %s178
          %181 = dma.hbm_to_vmem [thread:$0]  %s176, 128, %s179, %s168
        $region24: #{tpu_custom_call.1} parent=15 // pred_fallthru
          _
        // Predicated region
        $region25: #{tpu_custom_call.1} parent=15 // pred_check
          %p182 = pneg %p100
        $region26: #{tpu_custom_call.1} parent=15 // pred_check_branch
          %184 = sbr.rel (%p182) target = $region28
        $region27: #{tpu_custom_call.1} parent=15 // pred_region
          %s185 = sand.u32 %s16, 1
          %s186 = scalar_lea.sflag [#allocation9], %s185
          %s187 = sand.u32 %s90, 1
          %s188 = smul.addr %s187, 8
          %s189 = scalar_lea.vmem [#allocation10], %s188
          %s191 = ssub.s32 128, 128
          %192 = vsyncadd %s186, %s191
          %s193 = smul.addr %s24, 128
          %s194 = scalar_lea.hbm %s2, %s193
          %s196 = sshll.u32 %s189, 4
          %s197 = int_to_ptr.vmem [resolvable:$true] %s196
          %199 = dma.hbm_to_vmem [thread:$0]  %s194, 128, %s197, %s186
        $region28: #{tpu_custom_call.1} parent=15 // pred_fallthru
          _
      $region16: #{tpu_custom_call.1} parent=5 // pred_fallthru
        _
      %p200 = scmp.le.s32.totalorder 1, %s16
      %p201 = scmp.lt.s32.totalorder %s16, 5
      %p202 = pnand %p200, %p201
      %p203 = pneg %p202
      // Predicated region
      $region29: #{tpu_custom_call.1} parent=5 // pred_check
        _
      $region30: #{tpu_custom_call.1} parent=5 // pred_check_branch
        %205 = sbr.rel (%p202) target = $region32
      $region31: #{tpu_custom_call.1} parent=5 // pred_region
        %s206 = ssub.s32 %s16, 1
        %s207 = sand.u32 %s41, 1
        %s208 = scalar_lea.sflag [#allocation6], %s207
        %s209 = sand.u32 %s41, 1
        %s210 = smul.addr %s209, 8
        %s211 = scalar_lea.vmem [#allocation5], %s210
        // Predicated region
        $region33: #{tpu_custom_call.1} parent=31 // pred_check
          %p212 = pneg %p54
        $region34: #{tpu_custom_call.1} parent=31 // pred_check_branch
          %214 = sbr.rel (%p212) target = $region36
        $region35: #{tpu_custom_call.1} parent=31 // pred_region
          %215 = dma.done %s208, 128
        $region36: #{tpu_custom_call.1} parent=31 // pred_fallthru
          _
        %s216 = sand.u32 %s21, 1
        %s217 = scalar_lea.sflag [#allocation9], %s216
        %s218 = sand.u32 %s67, 1
        %s219 = smul.addr %s218, 8
        %s220 = scalar_lea.vmem [#allocation8], %s219
        // Predicated region
        $region37: #{tpu_custom_call.1} parent=31 // pred_check
          %p221 = pneg %p80
        $region38: #{tpu_custom_call.1} parent=31 // pred_check_branch
          %223 = sbr.rel (%p221) target = $region40
        $region39: #{tpu_custom_call.1} parent=31 // pred_region
          %224 = dma.done %s217, 128
        $region40: #{tpu_custom_call.1} parent=31 // pred_fallthru
          _
        %s225 = sand.u32 %s21, 1
        %s226 = scalar_lea.sflag [#allocation9], %s225
        %s227 = sand.u32 %s93, 1
        %s228 = smul.addr %s227, 8
        %s229 = scalar_lea.vmem [#allocation10], %s228
        // Predicated region
        $region41: #{tpu_custom_call.1} parent=31 // pred_check
          %p230 = pneg %p106
        $region42: #{tpu_custom_call.1} parent=31 // pred_check_branch
          %232 = sbr.rel (%p230) target = $region44
        $region43: #{tpu_custom_call.1} parent=31 // pred_region
          %233 = dma.done %s226, 128
        $region44: #{tpu_custom_call.1} parent=31 // pred_fallthru
          _
        %s234 = sand.u32 %s41, 1
        %s235 = scalar_lea.sflag [#allocation6], %s234
        %s236 = sand.u32 %s41, 1
        %s237 = smul.addr %s236, 8
        %s238 = scalar_lea.vmem [#allocation5], %s237
        %p239 = pneg %p54
        %p240 = pneg %p51
        %s241 = sand.u32 %s21, 1
        %s242 = scalar_lea.sflag [#allocation9], %s241
        %s243 = sand.u32 %s67, 1
        %s244 = smul.addr %s243, 8
        %s245 = scalar_lea.vmem [#allocation8], %s244
        %p246 = pneg %p80
        %p247 = pneg %p77
        %s248 = sand.u32 %s21, 1
        %s249 = scalar_lea.sflag [#allocation9], %s248
        %s250 = sand.u32 %s93, 1
        %s251 = smul.addr %s250, 8
        %s252 = scalar_lea.vmem [#allocation10], %s251
        %p253 = pneg %p106
        %p254 = pneg %p103
        %p255 = pneg %p127
        %p256 = pneg %p124
        %v257 = vld [vmem:[%s211] sm:$0xff]
        %v258 = vmul.f32 %v257, %v257
        %vm259 = vcmask 261120
        %v260 = vsel %vm259, %v258, 0.0
        %261 = vadd.xlane.f32.xlu0 %v260
        %v262 = vpop.xlane.xlu0 %261
        %v263 = vmax.f32 %v262, 1e-24
        %v264 = vrsqrt.pop %v263
        %v265 = vmul.f32 %v264, 5.0
        %v266 = vmul.f32 %v257, %v265
        %v267 = vld [vmem:[%s229] sm:$0xff]
        %v268 = vmul.f32 %v267, %v267
        %v269 = vsel %vm259, %v268, 0.0
        %270 = vadd.xlane.f32.xlu0 %v269
        %v271 = vpop.xlane.xlu0 %270
        %v272 = vmax.f32 %v271, 1e-24
        %v273 = vrsqrt.pop %v272
        %v274 = vmul.f32 %v267, %v273
        %v276 = vsel %vm259, %v266, 0
        %v279 = vsel %vm259, %v274, 0
        %281 = vmatprep.subr.mxu0 0.0
        %282 = vmatpush1.xpose.msra.mxu0 0.0
        %283 = vmatprep.subr.mxu0 0.0
        %284 = vmatpush1.xpose.msra.mxu0 0.0
        %285 = vmatprep.subr.mxu0 0.0
        %286 = vmatpush1.xpose.msra.mxu0 0.0
        %287 = vmatprep.subr.mxu0 0.0
        %288 = vmatpush1.xpose.msra.mxu0 0.0
        %289 = vmatprep.subr.mxu0 0.0
        %290 = vmatpush1.xpose.msra.mxu0 0.0
        %291 = vmatprep.subr.mxu0 0.0
        %292 = vmatpush1.xpose.msra.mxu0 0.0
        %293 = vmatprep.subr.mxu0 0.0
        %294 = vmatpush1.xpose.msra.mxu0 0.0
        %295 = vmatprep.subr.mxu0 0.0
        %296 = vmatpush1.xpose.msra.mxu0 0.0
        %297 = vmatprep.subr.mxu0 0.0
        %298 = vmatpush1.xpose.msra.mxu0 0.0
        %299 = vmatprep.subr.mxu0 0.0
        %300 = vmatpush1.xpose.msra.mxu0 0.0
        %301 = vmatprep.subr.mxu0 0.0
        %302 = vmatpush1.xpose.msra.mxu0 0.0
        %303 = vmatprep.subr.mxu0 0.0
        %304 = vmatpush1.xpose.msra.mxu0 0.0
        %305 = vmatprep.subr.mxu0 0.0
        %306 = vmatpush1.xpose.msra.mxu0 0.0
        %307 = vmatprep.subr.mxu0 0.0
        %308 = vmatpush1.xpose.msra.mxu0 0.0
        %309 = vmatprep.subr.mxu0 0.0
        %310 = vmatpush1.xpose.msra.mxu0 0.0
        %311 = vmatprep.subr.mxu0 0.0
        %312 = vmatpush1.xpose.msra.mxu0 %v279
        %313 = vmatprep.subr.mxu0 0.0
        %314 = vmatpush2.xpose.msra.mxu0 0.0
        %315 = vmatprep.subr.mxu0 0.0
        %316 = vmatpush2.xpose.msra.mxu0 0.0
        %317 = vmatprep.subr.mxu0 0.0
        %318 = vmatpush2.xpose.msra.mxu0 0.0
        %319 = vmatprep.subr.mxu0 0.0
        %320 = vmatpush2.xpose.msra.mxu0 0.0
        %321 = vmatprep.subr.mxu0 0.0
        %322 = vmatpush2.xpose.msra.mxu0 0.0
        %323 = vmatprep.subr.mxu0 0.0
        %324 = vmatpush2.xpose.msra.mxu0 0.0
        %325 = vmatprep.subr.mxu0 0.0
        %326 = vmatpush2.xpose.msra.mxu0 0.0
        %327 = vmatprep.subr.mxu0 0.0
        %328 = vmatpush2.xpose.msra.mxu0 0.0
        %329 = vmatprep.subr.mxu0 0.0
        %330 = vmatpush2.xpose.msra.mxu0 0.0
        %331 = vmatprep.subr.mxu0 0.0
        %332 = vmatpush2.xpose.msra.mxu0 0.0
        %333 = vmatprep.subr.mxu0 0.0
        %334 = vmatpush2.xpose.msra.mxu0 0.0
        %335 = vmatprep.subr.mxu0 0.0
        %336 = vmatpush2.xpose.msra.mxu0 0.0
        %337 = vmatprep.subr.mxu0 0.0
        %338 = vmatpush2.xpose.msra.mxu0 0.0
        %339 = vmatprep.subr.mxu0 0.0
        %340 = vmatpush2.xpose.msra.mxu0 0.0
        %341 = vmatprep.subr.mxu0 0.0
        %342 = vmatpush2.xpose.msra.mxu0 0.0
        %343 = vmatprep.subr.mxu0 0.0
        %344 = vmatpush2.xpose.msra.mxu0 0.0
        %345 = vmatprep.mubr.f32.mxu0 0.0
        %346 = vmatmul.mubr.f32.gmra.mxu0 %v276
        %v347 = vpop.f32.mrf.mxu0
        %v348 = vadd.f32 0.0, %v347
        %v349 = vpop.f32.mrf.mxu0
        %350 = vdwg.mxu0
        %v351 = vsub.f32 %v348, 5.0
        %v352 = vmul.f32 %v351, 1.442695
        %v353 = vpow.pop %v352
        %vm354 = vcmask 64512
        %v355 = vsel %vm354, %v353, 0.0
        %356 = vadd.xlane.f32.xlu0 %v355
        %v357 = vpop.xlane.xlu0 %356
        %v358 = vrot.slane %v355, 4
        %v359 = vadd.f32 %v355, %v358
        %v360 = vrot.slane %v359, 2
        %v361 = vadd.f32 %v359, %v360
        %v362 = vrot.slane %v361, 1
        %v363 = vadd.f32 %v361, %v362
        %p364 = scmp.eq.s32.totalorder %s25, 0
        %p365 = scmp.eq.s32.totalorder %s26, 0
        %p366 = pnand %p364, %p365
        %p367 = pneg %p366
        // Predicated region
        $region45: #{tpu_custom_call.1} parent=31 // pred_check
          _
        $region46: #{tpu_custom_call.1} parent=31 // pred_check_branch
          %369 = sbr.rel (%p366) target = $region48
        $region47: #{tpu_custom_call.1} parent=31 // pred_region
          %vm370 = vcmask 0
          %371 = vst.msk [vmem:[#allocation4] sm:$0x1] %vm370, 0.0
        $region48: #{tpu_custom_call.1} parent=31 // pred_fallthru
          _
        // Predicated region
        $region49: #{tpu_custom_call.1} parent=31 // pred_check
          %p372 = pneg %p365
        $region50: #{tpu_custom_call.1} parent=31 // pred_check_branch
          %374 = sbr.rel (%p372) target = $region52
        $region51: #{tpu_custom_call.1} parent=31 // pred_region
          %vm375 = vcmask 7168
          %376 = vst.msk [vmem:[#allocation2] sm:$0xff] %vm375, %v357
          %v377 = vld [vmem:[%s220] sm:$0xff]
          %v378 = vmul.f32 %v377, %v377
          %v379 = vsel %vm259, %v378, 0.0
          %380 = vadd.xlane.f32.xlu0 %v379
          %v381 = vpop.xlane.xlu0 %380
          %v382 = vmax.f32 %v381, 1e-24
          %v383 = vrsqrt.pop %v382
          %v384 = vmul.f32 %v377, %v383
          %v385 = vmul.f32 %v266, %v384
          %v386 = vsel %vm259, %v385, 0.0
          %387 = vadd.xlane.f32.xlu0 %v386
          %v388 = vpop.xlane.xlu0 %387
          %v389 = vld [vmem:[#allocation4] sm:$0x1]
          %v390 = vrot.slane %v388, 4
          %v391 = vadd.f32 %v388, %v390
          %v392 = vrot.slane %v391, 2
          %v393 = vadd.f32 %v391, %v392
          %v394 = vrot.slane %v393, 1
          %v395 = vadd.f32 %v393, %v394
          %v396 = vmul.f32 %v395, 2.0
          %v397 = vsub.f32 %v389, %v396
          %vm398 = vcmask 0
          %399 = vst.msk [vmem:[#allocation4] sm:$0x1] %vm398, %v397
        $region52: #{tpu_custom_call.1} parent=31 // pred_fallthru
          _
        %p400 = scmp.gt.s32.totalorder %s26, 0
        // Predicated region
        $region53: #{tpu_custom_call.1} parent=31 // pred_check
          %p401 = pneg %p400
        $region54: #{tpu_custom_call.1} parent=31 // pred_check_branch
          %403 = sbr.rel (%p401) target = $region56
        $region55: #{tpu_custom_call.1} parent=31 // pred_region
          %v404 = vld [vmem:[#allocation2] sm:$0xff]
          %v405 = vadd.f32 %v404, %v357
          %vm406 = vcmask 7168
          %407 = vst.msk [vmem:[#allocation2] sm:$0xff] %vm406, %v405
        $region56: #{tpu_custom_call.1} parent=31 // pred_fallthru
          _
        // Predicated region
        $region57: #{tpu_custom_call.1} parent=31 // pred_check
          %p408 = pneg %p364
        $region58: #{tpu_custom_call.1} parent=31 // pred_check_branch
          %410 = sbr.rel (%p408) target = $region60
        $region59: #{tpu_custom_call.1} parent=31 // pred_region
          %s411 = scalar_lea.vmem [#allocation3], %s26
          %vm412 = vcmask 57344
          %413 = vst.msk [vmem:[%s411] sm:$0x1] %vm412, %v363
        $region60: #{tpu_custom_call.1} parent=31 // pred_fallthru
          _
        %p414 = scmp.gt.s32.totalorder %s25, 0
        // Predicated region
        $region61: #{tpu_custom_call.1} parent=31 // pred_check
          %p415 = pneg %p414
        $region62: #{tpu_custom_call.1} parent=31 // pred_check_branch
          %417 = sbr.rel (%p415) target = $region64
        $region63: #{tpu_custom_call.1} parent=31 // pred_region
          %s418 = scalar_lea.vmem [#allocation3], %s26
          %v419 = vld [vmem:[%s418] sm:$0x1]
          %v420 = vadd.f32 %v419, %v363
          %vm421 = vcmask 57344
          %422 = vst.msk [vmem:[%s418] sm:$0x1] %vm421, %v420
        $region64: #{tpu_custom_call.1} parent=31 // pred_fallthru
          _
        %p423 = scmp.eq.s32.totalorder %s26, 1
        // Predicated region
        $region65: #{tpu_custom_call.1} parent=31 // pred_check
          %p424 = pneg %p423
        $region66: #{tpu_custom_call.1} parent=31 // pred_check_branch
          %426 = sbr.rel (%p424) target = $region68
        $region67: #{tpu_custom_call.1} parent=31 // pred_region
          %v427 = vld [vmem:[#allocation2] sm:$0xff]
          %v428 = vlog2.pop %v427
          %v429 = vmul.f32 %v428, 0.6931472
          %v430 = vadd.f32 %v429, 5.0
          %v431 = vld [vmem:[#allocation4] sm:$0x1]
          %vm432 = vcmask 7168
          %v433 = vsel %vm432, %v430, 0.0
          %v434 = vrot.slane %v433, 4
          %v435 = vadd.f32 %v433, %v434
          %v436 = vrot.slane %v435, 2
          %v437 = vadd.f32 %v435, %v436
          %v438 = vrot.slane %v437, 1
          %v439 = vadd.f32 %v437, %v438
          %v440 = vadd.f32 %v431, %v439
          %vm441 = vcmask 0
          %442 = vst.msk [vmem:[#allocation4] sm:$0x1] %vm441, %v440
        $region68: #{tpu_custom_call.1} parent=31 // pred_fallthru
          _
        %p443 = scmp.eq.s32.totalorder %s25, 1
        // Predicated region
        $region69: #{tpu_custom_call.1} parent=31 // pred_check
          %p444 = pneg %p443
        $region70: #{tpu_custom_call.1} parent=31 // pred_check_branch
          %446 = sbr.rel (%p444) target = $region72
        $region71: #{tpu_custom_call.1} parent=31 // pred_region
          %s447 = scalar_lea.vmem [#allocation3], %s26
          %v448 = vld [vmem:[%s447] sm:$0x1]
          %v449 = vlog2.pop %v448
          %v450 = vmul.f32 %v449, 0.6931472
          %v451 = vadd.f32 %v450, 5.0
          %v452 = vld [vmem:[#allocation4] sm:$0x1]
          %vm453 = vcmask 57344
          %v454 = vsel %vm453, %v451, 0.0
          %455 = vadd.xlane.f32.xlu0 %v454
          %v456 = vpop.xlane.xlu0 %455
          %v457 = vadd.f32 %v452, %v456
          %vm458 = vcmask 0
          %459 = vst.msk [vmem:[#allocation4] sm:$0x1] %vm458, %v457
        $region72: #{tpu_custom_call.1} parent=31 // pred_fallthru
          _
        %p460 = pnand %p443, %p423
        %p461 = pneg %p460
        // Predicated region
        $region73: #{tpu_custom_call.1} parent=31 // pred_check
          _
        $region74: #{tpu_custom_call.1} parent=31 // pred_check_branch
          %463 = sbr.rel (%p460) target = $region76
        $region75: #{tpu_custom_call.1} parent=31 // pred_region
          %v464 = vld [vmem:[#allocation4] sm:$0x1]
          %v465 = vmul.f32 %v464, 0.03125
          %vm466 = vcmask 0
          %467 = vst.msk [vmem:[#allocation11] sm:$0x1] %vm466, %v465
        $region76: #{tpu_custom_call.1} parent=31 // pred_fallthru
          _
        // Predicated region
        $region77: #{tpu_custom_call.1} parent=31 // pred_check
          %p468 = pneg %p124
        $region78: #{tpu_custom_call.1} parent=31 // pred_check_branch
          %470 = sbr.rel (%p468) target = $region80
        $region79: #{tpu_custom_call.1} parent=31 // pred_region
          %s472 = ssub.s32 16, 16
          %473 = vsyncadd [#allocation7], %s472
          %s475 = sshll.u32 [#allocation11], 4
          %s476 = int_to_ptr.vmem [resolvable:$true] %s475
          %478 = dma.vmem_to_hbm [thread:$0]  %s476, 16, %s3, [#allocation7]
        $region80: #{tpu_custom_call.1} parent=31 // pred_fallthru
          _
        // Predicated region
        $region81: #{tpu_custom_call.1} parent=31 // pred_check
          %p479 = pneg %p124
        $region82: #{tpu_custom_call.1} parent=31 // pred_check_branch
          %481 = sbr.rel (%p479) target = $region84
        $region83: #{tpu_custom_call.1} parent=31 // pred_region
          %482 = dma.done [#allocation7], 16
        $region84: #{tpu_custom_call.1} parent=31 // pred_fallthru
          _
      $region32: #{tpu_custom_call.1} parent=5 // pred_fallthru
        _
      %p483 = scmp.le.s32.totalorder 2, %s16
      // Predicated region
      $region85: #{tpu_custom_call.1} parent=5 // pred_check
        %p484 = pneg %p483
      $region86: #{tpu_custom_call.1} parent=5 // pred_check_branch
        %486 = sbr.rel (%p484) target = $region88
      $region87: #{tpu_custom_call.1} parent=5 // pred_region
        %s487 = ssub.s32 %s16, 2
      $region88: #{tpu_custom_call.1} parent=5 // pred_fallthru
        _
    $region6: #{tpu_custom_call.1} parent=1 // loop_footer
      %s20 = sadd.s32 1, %s16
    $region7: #{tpu_custom_call.1} parent=1 // loop_footer_branch
      %15 = sbr.rel target = $region3
    $region8: #{tpu_custom_call.1} parent=1 // loop_exit
      _
    %488 = vsyncpa [#allocation6], 1
    %s489 = scalar_lea.sflag [#allocation6], 1
    %490 = vsyncpa %s489, 1
    %491 = vsyncpa [#allocation9], 1
    %s492 = scalar_lea.sflag [#allocation9], 1
    %493 = vsyncpa %s492, 1
    %494 = vsyncpa [#allocation7], 1
    %s495 = scalar_lea.sflag [#allocation7], 1
    %496 = vsyncpa %s495, 1

</llo_original>
